<compile_context>
chip_gen: v7x
topology: tpu7x:2x2x1
jax: 0.10.0
libtpu: 0.0.40
codegen_flags: <defaults>
</compile_context>

<pallas_src>
import numpy as np
import jax
import jax.numpy as jnp
from jax.experimental import pallas as pl
from jax.experimental.pallas import tpu as pltpu


def geq_kernel(scal_ref, s1_ref, a_ref, a_on_ref, a_onsq_ref, out_ref):
    """One batch tile of the GEQ projection, in the permuted/padded column order.

    scal_ref (SMEM, scalar prefetch): [intercept, threshold_lower, inv_norm]
    s1_ref   (VMEM): (TB, n1_pad)  gathered + zero-padded ixs1 columns of x
    a_ref    (VMEM): (1, n1_pad)   -weights, zero padded
    a_on_ref (VMEM): (1, n1_pad)   a / ||a||
    a_onsq   (VMEM): (1, n1_pad)   a / ||a||^2
    out_ref  (VMEM): (TB, n1_pad)  projected / softplus-corrected points
    """
    intercept = scal_ref[0]
    tl = scal_ref[1]
    inv_norm = scal_ref[2]

    a = a_ref[...]            # (1, n1_pad), resident across grid steps
    a_on = a_on_ref[...]      # (1, n1_pad)
    a_onsq = a_onsq_ref[...]  # (1, n1_pad)

    # split1 = softplus(split1 - tl) + tl   (EUP exp/log path, f32)
    s1 = jnp.logaddexp(s1_ref[...] - tl, 0.0) + tl              # (TB, n1_pad)

    # Signed distance numerator: split1 @ a - intercept (pad lanes of a are 0).
    d = jnp.sum(s1 * a, axis=-1, keepdims=True) - intercept     # (TB, 1)

    distance = d * inv_norm
    corrected_distance = -jnp.logaddexp(-distance, 0.0)         # -softplus(-d)

    # plane_point + corrected_distance * a/||a||, with precomputed reciprocals.
    out_ref[...] = s1 - d * a_onsq + corrected_distance * a_on


def geq_interaction_forward(x, ixs1, ixs_less_than, weights, intercept,
                            threshold_lower=-10.0, block_rows=512):
    ixs1 = list(ixs1)
    ixs_lt = list(ixs_less_than)
    n1, n2 = len(ixs1), len(ixs_lt)
    forward_transform = ixs1 + ixs_lt
    rev = np.argsort(forward_transform)          # inverse column permutation

    x = x.astype(jnp.float32)
    B = x.shape[0]

    # --- lane-dense feature padding (multiple of 128) -----------------------
    n1_pad = ((n1 + 127) // 128) * 128

    # --- batch tiling (multiple of 8 sublanes, pipelined over a grid) -------
    TB = min(block_rows, ((B + 7) // 8) * 8)
    TB = ((TB + 7) // 8) * 8
    B_pad = ((B + TB - 1) // TB) * TB
    grid = (B_pad // TB,)

    # Gather the inequality columns once; pad batch & lanes with zeros.
    split1 = x[:, np.asarray(ixs1)]                               # (B, n1)
    split1 = jnp.pad(split1, ((0, B_pad - B), (0, n1_pad - n1)))  # (B_pad, n1_pad)

    # Precompute all weight-derived constants in the wrapper.
    a = -jnp.asarray(weights, dtype=jnp.float32).reshape(1, n1)
    norm_sq = jnp.sum(a * a)
    inv_norm = 1.0 / jnp.sqrt(norm_sq)
    inv_norm_sq = 1.0 / norm_sq
    a_pad = jnp.pad(a, ((0, 0), (0, n1_pad - n1)))                # (1, n1_pad)
    a_over_norm = a_pad * inv_norm
    a_over_norm_sq = a_pad * inv_norm_sq

    scalars = jnp.concatenate([
        jnp.asarray([intercept, threshold_lower], dtype=jnp.float32),
        jnp.reshape(inv_norm, (1,)).astype(jnp.float32),
    ])

    out_pad = pl.pallas_call(
        geq_kernel,
        out_shape=jax.ShapeDtypeStruct((B_pad, n1_pad), jnp.float32),
        grid_spec=pltpu.PrefetchScalarGridSpec(
            num_scalar_prefetch=1,
            grid=grid,
            in_specs=[
                pl.BlockSpec((TB, n1_pad), lambda i, s: (i, 0)),   # split1 tile
                pl.BlockSpec((1, n1_pad), lambda i, s: (0, 0)),    # a (resident)
                pl.BlockSpec((1, n1_pad), lambda i, s: (0, 0)),    # a/||a||
                pl.BlockSpec((1, n1_pad), lambda i, s: (0, 0)),    # a/||a||^2
            ],
            out_specs=pl.BlockSpec((TB, n1_pad), lambda i, s: (i, 0)),
        ),
        compiler_params=pltpu.CompilerParams(
            dimension_semantics=("parallel",),          # megacore-shard batch
            vmem_limit_bytes=32 * 1024 * 1024,          # safe on v5e/v6e/v7x
        ),
    )(scalars, split1, a_pad, a_over_norm, a_over_norm_sq)

    new_point = out_pad[:B, :n1]                                  # drop padding

    # Build the final (B, n1+n2) result in ONE pass: inverse column permutation
    # fused with the threshold_lower constant fill (no concat, no extra read of
    # constant columns).
    geq_mask = rev < n1                       # output column comes from new_point?
    src_idx = np.where(geq_mask, rev, 0)      # gather index into new_point
    out = jnp.where(jnp.asarray(geq_mask)[None, :],
                    new_point[:, np.asarray(src_idx)],
                    jnp.float32(threshold_lower))
    return out


def geq_interaction_reference(x, ixs1, ixs_less_than, weights, intercept,
                              threshold_lower=-10.0):
    """Pure-JAX port of the PyTorch forward, used for correctness check."""
    x = x.astype(jnp.float32)
    split1 = x[:, np.asarray(ixs1)]
    split2 = x[:, np.asarray(ixs_less_than)]
    split1 = jax.nn.softplus(split1 - threshold_lower) + threshold_lower
    a = -jnp.asarray(weights, dtype=jnp.float32).reshape(-1, 1)   # (n1, 1)
    dot_prod = split1 @ a
    norm = jnp.linalg.norm(a)
    distance = (dot_prod - intercept) / norm
    corrected_distance = -jax.nn.softplus(-distance)
    pp_ = (dot_prod - intercept) / norm ** 2
    plane_point = split1 - pp_ * a.T
    corrected_distance_vec = corrected_distance * (a.T / norm)
    new_point = plane_point + corrected_distance_vec
    restricted2 = jnp.ones_like(split2) * threshold_lower
    rev = np.argsort(list(ixs1) + list(ixs_less_than))
    return jnp.concatenate([new_point, restricted2], axis=1)[:, rev]


if __name__ == "__main__":
    key = jax.random.PRNGKey(0)

    # --- Test 1: small deterministic problem (B=8, D=16) --------------------
    B, D = 8, 16
    ixs1 = [1, 3, 5, 7, 9, 11]
    ixs_less_than = [0, 2, 4, 6, 8, 10, 12, 13, 14, 15]
    weights = [0.5, -1.0, 1.5, 2.0, -0.5, 0.25]
    intercept = 0.7
    threshold_lower = -10.0

    k1, k2 = jax.random.split(key)
    x = jax.random.normal(k1, (B, D), dtype=jnp.float32)

    out = geq_interaction_forward(x, ixs1, ixs_less_than, weights, intercept,
                                  threshold_lower)
    out = jax.block_until_ready(out)
    ref = geq_interaction_reference(x, ixs1, ixs_less_than, weights, intercept,
                                    threshold_lower)
    assert out.shape == (B, D)
    np.testing.assert_allclose(np.asarray(out), np.asarray(ref),
                               rtol=1e-5, atol=1e-5)

    # --- Test 2: batch not a multiple of the tile, multi-block grid ---------
    B2 = 777
    x2 = jax.random.normal(k2, (B2, D), dtype=jnp.float32)
    out2 = geq_interaction_forward(x2, ixs1, ixs_less_than, weights, intercept,
                                   threshold_lower, block_rows=256)
    out2 = jax.block_until_ready(out2)
    ref2 = geq_interaction_reference(x2, ixs1, ixs_less_than, weights, intercept,
                                     threshold_lower)
    np.testing.assert_allclose(np.asarray(out2), np.asarray(ref2),
                               rtol=1e-5, atol=1e-5)

    print("KERNEL_OK")
</pallas_src>

<mosaic_0001>
module attributes {stable_mosaic.version = 11 : i64} {
  func.func @geq_kernel(%arg0: i32, %arg1: memref<3xf32, #tpu.memory_space<smem>>, %arg2: memref<8x128xf32, #tpu.memory_space<vmem>>, %arg3: memref<1x128xf32, #tpu.memory_space<vmem>>, %arg4: memref<1x128xf32, #tpu.memory_space<vmem>>, %arg5: memref<1x128xf32, #tpu.memory_space<vmem>>, %arg6: memref<8x128xf32, #tpu.memory_space<vmem>>) attributes {dimension_semantics = [#tpu.dimension_semantics<parallel>], iteration_bounds = array<i64: 1>, scalar_prefetch = 1 : i64, scratch_operands = 0 : i64, tpu.core_type = #tpu.core_type<tc>, window_params = [{transform_indices = @transform_0, window_bounds = array<i64: 8, 128>}, {pipeline_mode = #tpu.pipeline_mode<synchronous>, transform_indices = @transform_1, window_bounds = array<i64: 1, 128>}, {pipeline_mode = #tpu.pipeline_mode<synchronous>, transform_indices = @transform_2, window_bounds = array<i64: 1, 128>}, {pipeline_mode = #tpu.pipeline_mode<synchronous>, transform_indices = @transform_3, window_bounds = array<i64: 1, 128>}, {transform_indices = @transform_4, window_bounds = array<i64: 8, 128>}]} {
    %c0 = arith.constant 0 : index
    %0 = memref.load %arg1[%c0] : memref<3xf32, #tpu.memory_space<smem>>
    %c1 = arith.constant 1 : index
    %1 = memref.load %arg1[%c1] : memref<3xf32, #tpu.memory_space<smem>>
    %c2 = arith.constant 2 : index
    %2 = memref.load %arg1[%c2] : memref<3xf32, #tpu.memory_space<smem>>
    %c0_0 = arith.constant 0 : index
    %c0_1 = arith.constant 0 : index
    %3 = vector.load %arg3[%c0_0, %c0_1] : memref<1x128xf32, #tpu.memory_space<vmem>>, vector<1x128xf32>
    %c0_2 = arith.constant 0 : index
    %c0_3 = arith.constant 0 : index
    %4 = vector.load %arg4[%c0_2, %c0_3] : memref<1x128xf32, #tpu.memory_space<vmem>>, vector<1x128xf32>
    %c0_4 = arith.constant 0 : index
    %c0_5 = arith.constant 0 : index
    %5 = vector.load %arg5[%c0_4, %c0_5] : memref<1x128xf32, #tpu.memory_space<vmem>>, vector<1x128xf32>
    %c0_6 = arith.constant 0 : index
    %c0_7 = arith.constant 0 : index
    %6 = vector.load %arg2[%c0_6, %c0_7] : memref<8x128xf32, #tpu.memory_space<vmem>>, vector<8x128xf32>
    %7 = vector.broadcast %1 : f32 to vector<8x128xf32>
    %8 = arith.subf %6, %7 : vector<8x128xf32>
    %cst = arith.constant 0.000000e+00 : f32
    %9 = vector.broadcast %cst : f32 to vector<8x128xf32>
    %10 = arith.maximumf %8, %9 : vector<8x128xf32>
    %11 = vector.broadcast %cst : f32 to vector<8x128xf32>
    %12 = arith.subf %8, %11 : vector<8x128xf32>
    %13 = arith.cmpf one, %12, %12 : vector<8x128xf32>
    %14 = vector.broadcast %cst : f32 to vector<8x128xf32>
    %15 = arith.addf %8, %14 : vector<8x128xf32>
    %16 = math.absf %12 : vector<8x128xf32>
    %cst_8 = arith.constant 0.000000e+00 : f32
    %17 = vector.broadcast %cst_8 : f32 to vector<8x128xf32>
    %18 = arith.subf %17, %16 : vector<8x128xf32>
    %19 = math.exp %18 : vector<8x128xf32>
    %20 = math.log1p %19 : vector<8x128xf32>
    %21 = arith.addf %10, %20 : vector<8x128xf32>
    %22 = arith.select %13, %15, %21 : vector<8x128xi1>, vector<8x128xf32>
    %23 = vector.broadcast %1 : f32 to vector<8x128xf32>
    %24 = arith.addf %22, %23 : vector<8x128xf32>
    %25 = vector.broadcast %3 : vector<1x128xf32> to vector<8x128xf32>
    %26 = arith.mulf %24, %25 : vector<8x128xf32>
    %cst_9 = arith.constant dense<0.000000e+00> : vector<8xf32>
    %27 = vector.multi_reduction <add>, %26, %cst_9 [1] : vector<8x128xf32> to vector<8xf32>
    %28 = vector.shape_cast %27 : vector<8xf32> to vector<8x1xf32>
    %29 = vector.broadcast %0 : f32 to vector<8x1xf32>
    %30 = arith.subf %28, %29 : vector<8x1xf32>
    %31 = vector.broadcast %2 : f32 to vector<8x1xf32>
    %32 = arith.mulf %30, %31 : vector<8x1xf32>
    %cst_10 = arith.constant 0.000000e+00 : f32
    %33 = vector.broadcast %cst_10 : f32 to vector<8x1xf32>
    %34 = arith.subf %33, %32 : vector<8x1xf32>
    %cst_11 = arith.constant 0.000000e+00 : f32
    %35 = vector.broadcast %cst_11 : f32 to vector<8x1xf32>
    %36 = arith.maximumf %34, %35 : vector<8x1xf32>
    %37 = vector.broadcast %cst_11 : f32 to vector<8x1xf32>
    %38 = arith.subf %34, %37 : vector<8x1xf32>
    %39 = arith.cmpf one, %38, %38 : vector<8x1xf32>
    %40 = vector.broadcast %cst_11 : f32 to vector<8x1xf32>
    %41 = arith.addf %34, %40 : vector<8x1xf32>
    %42 = math.absf %38 : vector<8x1xf32>
    %cst_12 = arith.constant 0.000000e+00 : f32
    %43 = vector.broadcast %cst_12 : f32 to vector<8x1xf32>
    %44 = arith.subf %43, %42 : vector<8x1xf32>
    %45 = math.exp %44 : vector<8x1xf32>
    %46 = math.log1p %45 : vector<8x1xf32>
    %47 = arith.addf %36, %46 : vector<8x1xf32>
    %48 = arith.select %39, %41, %47 : vector<8x1xi1>, vector<8x1xf32>
    %cst_13 = arith.constant 0.000000e+00 : f32
    %49 = vector.broadcast %cst_13 : f32 to vector<8x1xf32>
    %50 = arith.subf %49, %48 : vector<8x1xf32>
    %51 = vector.broadcast %30 : vector<8x1xf32> to vector<8x128xf32>
    %52 = vector.broadcast %5 : vector<1x128xf32> to vector<8x128xf32>
    %53 = arith.mulf %51, %52 : vector<8x128xf32>
    %54 = arith.subf %24, %53 : vector<8x128xf32>
    %55 = vector.broadcast %50 : vector<8x1xf32> to vector<8x128xf32>
    %56 = vector.broadcast %4 : vector<1x128xf32> to vector<8x128xf32>
    %57 = arith.mulf %55, %56 : vector<8x128xf32>
    %58 = arith.addf %54, %57 : vector<8x128xf32>
    %c0_14 = arith.constant 0 : index
    %c0_15 = arith.constant 0 : index
    %59 = vector.load %arg6[%c0_14, %c0_15] : memref<8x128xf32, #tpu.memory_space<vmem>>, vector<8x128xf32>
    tpu.vector_store %arg6[%c0_14, %c0_15], %58 {strides = array<i32>} : memref<8x128xf32, #tpu.memory_space<vmem>>, vector<8x128xf32>,
    return
  }
  func.func @transform_0(%arg0: i32, %arg1: memref<3xf32, #tpu.memory_space<smem>>) -> (i32, i32) {
    %c0_i32 = arith.constant 0 : i32
    %c0_i32_0 = arith.constant 0 : i32
    return %arg0, %c0_i32 : i32, i32
  }
  func.func @transform_1(%arg0: i32, %arg1: memref<3xf32, #tpu.memory_space<smem>>) -> (i32, i32) {
    %c0_i32 = arith.constant 0 : i32
    %c0_i32_0 = arith.constant 0 : i32
    %c0_i32_1 = arith.constant 0 : i32
    return %c0_i32, %c0_i32_0 : i32, i32
  }
  func.func @transform_2(%arg0: i32, %arg1: memref<3xf32, #tpu.memory_space<smem>>) -> (i32, i32) {
    %c0_i32 = arith.constant 0 : i32
    %c0_i32_0 = arith.constant 0 : i32
    %c0_i32_1 = arith.constant 0 : i32
    return %c0_i32, %c0_i32_0 : i32, i32
  }
  func.func @transform_3(%arg0: i32, %arg1: memref<3xf32, #tpu.memory_space<smem>>) -> (i32, i32) {
    %c0_i32 = arith.constant 0 : i32
    %c0_i32_0 = arith.constant 0 : i32
    %c0_i32_1 = arith.constant 0 : i32
    return %c0_i32, %c0_i32_0 : i32, i32
  }
  func.func @transform_4(%arg0: i32, %arg1: memref<3xf32, #tpu.memory_space<smem>>) -> (i32, i32) {
    %c0_i32 = arith.constant 0 : i32
    %c0_i32_0 = arith.constant 0 : i32
    return %arg0, %c0_i32 : i32, i32
  }
}

</mosaic_0001>

<llo_original>
// kernel: tpu_custom_call.1
$region0: #{tpu_custom_call.1}
  #allocation0 [shape = 'u32[]', space=smem, size = 0x4, offset = 0x4, fixed_abs, tag = 'smem constant byte address 0x4 - core index']
  #allocation1 [shape = 'u32[144,128]{1,0:T(1,128)}', space=vmem, size = 0x12000, scoped, tag = 'internal scratch']
  #allocation2 [shape = 's32[1]{0}', space=sflag, size = 0x4, scoped, tag = 'scoped memory for tpu_custom_call.1']
  #allocation3 [shape = 'u8[512]{0}', space=smem, size = 0x200, scoped, tag = 'prefetched SMEM operand 0']
  %s0 = inlined_call_operand.hbm [shape: f32[3], index: 0, kind: input, shape index: {}]
  %s1 = inlined_call_operand.hbm [shape: f32[8,128], index: 1, kind: input, shape index: {}]
  %s2 = inlined_call_operand.vmem [shape: f32[1,128], index: 2, kind: input, shape index: {}]
  %s3 = inlined_call_operand.vmem [shape: f32[1,128], index: 3, kind: input, shape index: {}]
  %s4 = inlined_call_operand.vmem [shape: f32[1,128], index: 4, kind: input, shape index: {}]
  %s5 = inlined_call_operand.hbm [shape: f32[8,128], index: 5, kind: output, shape index: {}]
  %s6 = sld [smem:[#allocation0]]
  $region30: #{tpu_custom_call.1} parent=0
    _
  %s8 = ssub.s32 1, %s6
  %s9 = scalar_select 0, %s8, %s6
  %11 = dma.hbm_to_smem %s0, 16, [#allocation3], [#allocation2]
  %12 = dma.done [#allocation2], 16
  %13 = sfence
  $region1: #{tpu_custom_call.1} parent=0
    #allocation4 [shape = 'u8[4096]{0}', space=vmem, size = 0x1000, scoped, tag = 'input window, operand 1, single buffered']
    #allocation5 [shape = 's32[1]{0}', space=sflag, size = 0x4, scoped, tag = 'scoped memory for tpu_custom_call.1']
    #allocation6 [shape = 's32[1]{0}', space=sflag, size = 0x4, scoped, tag = 'scoped memory for tpu_custom_call.1']
    #allocation7 [shape = 'u8[4096]{0}', space=vmem, size = 0x1000, scoped, tag = 'output window, operand 0, single buffered']
    %14 = vsyncpa [#allocation5], 0
    %15 = vsyncpa [#allocation6], 0
    // Predicated region
    $region2: #{tpu_custom_call.1} parent=1 // pred_check
      _
    $region3: #{tpu_custom_call.1} parent=1 // pred_check_branch
      %17 = sbr.rel (0) target = $region5
    $region4: #{tpu_custom_call.1} parent=1 // pred_region
      %s19 = ssub.s32 128, 128
      %20 = vsyncadd [#allocation5], %s19
      %s22 = sshll.u32 [#allocation4], 4
      %s23 = int_to_ptr.vmem [resolvable:$true] %s22
      %25 = dma.hbm_to_vmem [thread:$0]  %s1, 128, %s23, [#allocation5]
    $region5: #{tpu_custom_call.1} parent=1 // pred_fallthru
      _
    // Predicated region
    $region6: #{tpu_custom_call.1} parent=1 // pred_check
      _
    $region7: #{tpu_custom_call.1} parent=1 // pred_check_branch
      %27 = sbr.rel (0) target = $region9
    $region8: #{tpu_custom_call.1} parent=1 // pred_region
      _
    $region9: #{tpu_custom_call.1} parent=1 // pred_fallthru
      _
    // Predicated region
    $region10: #{tpu_custom_call.1} parent=1 // pred_check
      _
    $region11: #{tpu_custom_call.1} parent=1 // pred_check_branch
      %29 = sbr.rel (0) target = $region13
    $region12: #{tpu_custom_call.1} parent=1 // pred_region
      _
    $region13: #{tpu_custom_call.1} parent=1 // pred_fallthru
      _
    // Predicated region
    $region14: #{tpu_custom_call.1} parent=1 // pred_check
      _
    $region15: #{tpu_custom_call.1} parent=1 // pred_check_branch
      %31 = sbr.rel (0) target = $region17
    $region16: #{tpu_custom_call.1} parent=1 // pred_region
      _
    $region17: #{tpu_custom_call.1} parent=1 // pred_fallthru
      _
    // Predicated region
    $region18: #{tpu_custom_call.1} parent=1 // pred_check
      _
    $region19: #{tpu_custom_call.1} parent=1 // pred_check_branch
      %33 = sbr.rel (0) target = $region21
    $region20: #{tpu_custom_call.1} parent=1 // pred_region
      %34 = dma.done [#allocation5], 128
    $region21: #{tpu_custom_call.1} parent=1 // pred_fallthru
      _
    %s35 = sld [smem:[#allocation3]]
    %s36 = sld [smem:[#allocation3 + $0x1]]
    %s37 = sld [smem:[#allocation3 + $0x2]]
    %v38 = vld [vmem:[%s2] sm:$0x1]
    %v39 = vld [vmem:[%s3] sm:$0x1]
    %v40 = vld [vmem:[%s4] sm:$0x1]
    %v41 = vld [vmem:[#allocation4] sm:$0xff]
    %v42 = vstv %s36
    %v43 = vsub.f32 %v41, %v42
    %v44 = vmax.f32 %v43, 0.0
    %vm45 = vcmp.ne.f32.partialorder %v43, %v43
    %v46 = vadd.f32 %v43, 0.0
    %v47 = vand.u32 2147483647, %v43
    %v48 = vsub.f32 0.0, %v47
    %v49 = vmul.f32 %v48, 1.442695
    %v50 = vpow.pop %v49
    %v51 = vadd.f32 %v50, 1.0
    %v52 = vlog2.pop %v51
    %v53 = vmul.f32 %v52, 0.6931472
    %v54 = vmul.f32 -0.5, %v50
    %v55 = vadd.f32 %v54, 1.0
    %v56 = vmul.f32 %v55, %v50
    %v57 = vand.u32 2147483647, %v50
    %vm58 = vcmp.lt.f32.partialorder %v57, 0.0004427343
    %v59 = vsel %vm58, %v56, %v53
    %v60 = vadd.f32 %v44, %v59
    %v61 = vsel %vm45, %v46, %v60
    %v62 = vadd.f32 %v61, %v42
    %v64 = vlaneseq
    %v65 = vshrl.u32 %v64, 7
    %v66 = vsub.s32 0, %v65
    %v67 = vrot.slane %v38, %v66
    %v69 = vmul.f32 %v62, %v67
    %70 = vadd.xlane.f32.xlu0 %v69
    %v71 = vpop.xlane.xlu0 %70
    %v72 = vstv %s35
    %v73 = vsub.f32 %v71, %v72
    %v74 = vstv %s37
    %v75 = vmul.f32 %v73, %v74
    %v76 = vsub.f32 0.0, %v75
    %v77 = vmax.f32 %v76, 0.0
    %vm78 = vcmp.ne.f32.partialorder %v76, %v76
    %v79 = vadd.f32 %v76, 0.0
    %v80 = vand.u32 2147483647, %v76
    %v81 = vsub.f32 0.0, %v80
    %v82 = vmul.f32 %v81, 1.442695
    %v83 = vpow.pop %v82
    %v84 = vadd.f32 %v83, 1.0
    %v85 = vlog2.pop %v84
    %v86 = vmul.f32 %v85, 0.6931472
    %v87 = vmul.f32 -0.5, %v83
    %v88 = vadd.f32 %v87, 1.0
    %v89 = vmul.f32 %v88, %v83
    %v90 = vand.u32 2147483647, %v83
    %vm91 = vcmp.lt.f32.partialorder %v90, 0.0004427343
    %v92 = vsel %vm91, %v89, %v86
    %v93 = vadd.f32 %v77, %v92
    %v94 = vsel %vm78, %v79, %v93
    %v95 = vsub.f32 0.0, %v94
    %v97 = vlaneseq
    %v98 = vshrl.u32 %v97, 7
    %v99 = vsub.s32 0, %v98
    %v100 = vrot.slane %v40, %v99
    %v102 = vmul.f32 %v73, %v100
    %v103 = vsub.f32 %v62, %v102
    %v105 = vlaneseq
    %v106 = vshrl.u32 %v105, 7
    %v107 = vsub.s32 0, %v106
    %v108 = vrot.slane %v39, %v107
    %v110 = vmul.f32 %v95, %v108
    %v111 = vadd.f32 %v103, %v110
    %112 = vst [vmem:[#allocation7] sm:$0xff] %v111
    // Predicated region
    $region22: #{tpu_custom_call.1} parent=1 // pred_check
      _
    $region23: #{tpu_custom_call.1} parent=1 // pred_check_branch
      %114 = sbr.rel (0) target = $region25
    $region24: #{tpu_custom_call.1} parent=1 // pred_region
      %s116 = ssub.s32 128, 128
      %117 = vsyncadd [#allocation6], %s116
      %s119 = sshll.u32 [#allocation7], 4
      %s120 = int_to_ptr.vmem [resolvable:$true] %s119
      %122 = dma.vmem_to_hbm [thread:$0]  %s120, 128, %s5, [#allocation6]
    $region25: #{tpu_custom_call.1} parent=1 // pred_fallthru
      _
    // Predicated region
    $region26: #{tpu_custom_call.1} parent=1 // pred_check
      _
    $region27: #{tpu_custom_call.1} parent=1 // pred_check_branch
      %124 = sbr.rel (0) target = $region29
    $region28: #{tpu_custom_call.1} parent=1 // pred_region
      %125 = dma.done [#allocation6], 128
    $region29: #{tpu_custom_call.1} parent=1 // pred_fallthru
      _
    %126 = vsyncpa [#allocation5], 1
    %127 = vsyncpa [#allocation6], 1

</llo_original>
